<compile_context>
chip_gen: v6e
topology: v6e:2x2x1
jax: 0.10.0
libtpu: 0.0.40
codegen_flags: <defaults>
</compile_context>

<pallas_src>
import jax
import jax.numpy as jnp
from jax.experimental import pallas as pl
from jax.experimental.pallas import tpu as pltpu

LANE = 128


def _round_up(x, m):
    return (x + m - 1) // m * m


def linreg_kernel(x_ref, w1_ref, b1_ref, w2_ref, b2_ref, o_ref):
    # x_ref : (TM, Cin_p)    dot dtype (bf16 or f32)
    # w1_ref: (Cin_p, H_p)   dot dtype        b1_ref: (1, H_p)   f32
    # w2_ref: (H_p, Cout_p)  dot dtype        b2_ref: (1, Cout_p) f32
    # o_ref : (TM, Cout_p)   f32
    x = x_ref[...]
    h = jnp.dot(x, w1_ref[...], preferred_element_type=jnp.float32) + b1_ref[...]
    h = jnp.tanh(h)                                   # f32 on VPU/EUP (v5e-safe)
    h = h.astype(w2_ref.dtype)                        # back to MXU dtype for 2nd dot
    out = jnp.dot(h, w2_ref[...], preferred_element_type=jnp.float32) + b2_ref[...]
    o_ref[...] = out.astype(o_ref.dtype)


def linreg_forward(x, w1, b1, w2, b2, *, tm=1024, dot_dtype=jnp.bfloat16):
    """Fused y = linear_2(tanh(linear_1(x))).

    x : (B, C_in) float32
    w1: (H, C_in), b1: (H,)      -- PyTorch nn.Linear layout
    w2: (C_out, H), b2: (C_out,)
    Returns (B, C_out) float32.
    """
    x = jnp.asarray(x, jnp.float32)
    B, c_in = x.shape
    H = w1.shape[0]
    c_out = w2.shape[0]

    # Lane-dense padding of all feature dims to a multiple of 128.
    c_in_p = _round_up(c_in, LANE)
    h_p = _round_up(H, LANE)
    c_out_p = _round_up(c_out, LANE)

    # Batch tile: multiple of 8 (sublane), capped at `tm`; pad B to a tile multiple.
    tm = max(8, min(tm, _round_up(B, 8)))
    b_p = _round_up(B, tm)

    # Zero-pad + pre-transpose weights to (in, out).  Padding is mathematically inert:
    # padded x cols hit zero W1 rows; padded hidden cols hit zero W2 rows.
    x_p = jnp.zeros((b_p, c_in_p), jnp.float32).at[:B, :c_in].set(x).astype(dot_dtype)
    w1_t = (jnp.zeros((c_in_p, h_p), jnp.float32)
            .at[:c_in, :H].set(jnp.asarray(w1, jnp.float32).T).astype(dot_dtype))
    w2_t = (jnp.zeros((h_p, c_out_p), jnp.float32)
            .at[:H, :c_out].set(jnp.asarray(w2, jnp.float32).T).astype(dot_dtype))
    b1_p = jnp.zeros((1, h_p), jnp.float32).at[0, :H].set(jnp.asarray(b1, jnp.float32))
    b2_p = jnp.zeros((1, c_out_p), jnp.float32).at[0, :c_out].set(
        jnp.asarray(b2, jnp.float32))

    grid = (b_p // tm,)
    in_bytes = jnp.dtype(dot_dtype).itemsize
    cost = pl.CostEstimate(
        flops=2 * b_p * (c_in_p * h_p + h_p * c_out_p),
        transcendentals=b_p * h_p,
        bytes_accessed=(b_p * c_in_p * in_bytes                 # x stream
                        + b_p * c_out_p * 4                     # out stream
                        + (c_in_p * h_p + h_p * c_out_p) * in_bytes
                        + (h_p + c_out_p) * 4),
    )

    out_p = pl.pallas_call(
        linreg_kernel,
        out_shape=jax.ShapeDtypeStruct((b_p, c_out_p), jnp.float32),
        grid_spec=pltpu.PrefetchScalarGridSpec(
            num_scalar_prefetch=0,
            grid=grid,
            in_specs=[
                pl.BlockSpec((tm, c_in_p), lambda i: (i, 0)),       # x: streamed / pipelined
                pl.BlockSpec((c_in_p, h_p), lambda i: (0, 0)),      # W1: VMEM-resident
                pl.BlockSpec((1, h_p), lambda i: (0, 0)),           # b1
                pl.BlockSpec((h_p, c_out_p), lambda i: (0, 0)),     # W2
                pl.BlockSpec((1, c_out_p), lambda i: (0, 0)),       # b2
            ],
            out_specs=pl.BlockSpec((tm, c_out_p), lambda i: (i, 0)),
        ),
        compiler_params=pltpu.CompilerParams(
            dimension_semantics=("parallel",),   # shard batch tiles across TCs on v7x
        ),
        cost_estimate=cost,
    )(x_p, w1_t, b1_p, w2_t, b2_p)

    return out_p[:B, :c_out]


def _ref_forward(x, w1, b1, w2, b2):
    h = jnp.tanh(x @ w1.T + b1)
    return h @ w2.T + b2


if __name__ == "__main__":
    key = jax.random.PRNGKey(0)
    k_x, k_w1, k_b1, k_w2, k_b2 = jax.random.split(key, 5)

    B, C_IN, H, C_OUT = 200, 13, 10, 13    # X_train.shape[1] -> 13 features

    x = jax.random.normal(k_x, (B, C_IN), dtype=jnp.float32)
    # PyTorch nn.Linear weight layout: (out_features, in_features)
    w1 = jax.random.normal(k_w1, (H, C_IN), dtype=jnp.float32) * 0.1
    b1 = jax.random.normal(k_b1, (H,), dtype=jnp.float32) * 0.1
    w2 = jax.random.normal(k_w2, (C_OUT, H), dtype=jnp.float32) * 0.1
    b2 = jax.random.normal(k_b2, (C_OUT,), dtype=jnp.float32) * 0.1

    ref = _ref_forward(x, w1, b1, w2, b2)

    # f32 MXU path (exact module semantics): strict check. tm=64 -> 4 grid steps,
    # exercises the batch pipeline plus row padding (200 -> 256).
    out_f32 = jax.block_until_ready(
        linreg_forward(x, w1, b1, w2, b2, tm=64, dot_dtype=jnp.float32))
    assert out_f32.shape == (B, C_OUT)
    assert jnp.allclose(out_f32, ref, atol=1e-5, rtol=1e-5)

    # bf16-operand path (v6e/v7x bandwidth optimization, f32 accumulate): loose check.
    out_bf16 = jax.block_until_ready(linreg_forward(x, w1, b1, w2, b2, tm=64))
    assert out_bf16.shape == (B, C_OUT)
    assert jnp.allclose(out_bf16, ref, atol=5e-2, rtol=5e-2)

    # TODO(synk): nn.MSELoss is training-only (not part of forward()); not implemented.
    print("KERNEL_OK")
</pallas_src>

<mosaic_0001>
module attributes {stable_mosaic.version = 11 : i64} {
  func.func @linreg_kernel(%arg0: i32, %arg1: memref<64x128xf32, #tpu.memory_space<vmem>>, %arg2: memref<128x128xf32, #tpu.memory_space<vmem>>, %arg3: memref<1x128xf32, #tpu.memory_space<vmem>>, %arg4: memref<128x128xf32, #tpu.memory_space<vmem>>, %arg5: memref<1x128xf32, #tpu.memory_space<vmem>>, %arg6: memref<64x128xf32, #tpu.memory_space<vmem>>) attributes {dimension_semantics = [#tpu.dimension_semantics<parallel>], iteration_bounds = array<i64: 4>, scalar_prefetch = 0 : i64, scratch_operands = 0 : i64, tpu.core_type = #tpu.core_type<tc>, window_params = [{transform_indices = @transform_0, window_bounds = array<i64: 64, 128>}, {pipeline_mode = #tpu.pipeline_mode<synchronous>, transform_indices = @transform_1, window_bounds = array<i64: 128, 128>}, {pipeline_mode = #tpu.pipeline_mode<synchronous>, transform_indices = @transform_2, window_bounds = array<i64: 1, 128>}, {pipeline_mode = #tpu.pipeline_mode<synchronous>, transform_indices = @transform_3, window_bounds = array<i64: 128, 128>}, {pipeline_mode = #tpu.pipeline_mode<synchronous>, transform_indices = @transform_4, window_bounds = array<i64: 1, 128>}, {transform_indices = @transform_5, window_bounds = array<i64: 64, 128>}]} {
    %c0 = arith.constant 0 : index
    %c0_0 = arith.constant 0 : index
    %0 = vector.load %arg1[%c0, %c0_0] : memref<64x128xf32, #tpu.memory_space<vmem>>, vector<64x128xf32>
    %c0_1 = arith.constant 0 : index
    %c0_2 = arith.constant 0 : index
    %1 = vector.load %arg2[%c0_1, %c0_2] : memref<128x128xf32, #tpu.memory_space<vmem>>, vector<128x128xf32>
    %cst = arith.constant dense<0.000000e+00> : vector<64x128xf32>
    %2 = tpu.matmul %0, %1, %cst {dimension_numbers = #tpu.dot_dimension_numbers<[1], [0], [0], [1], [0, 0, 1, 1], [], []>} : vector<64x128xf32>, vector<128x128xf32>, vector<64x128xf32> -> vector<64x128xf32>
    %c0_3 = arith.constant 0 : index
    %c0_4 = arith.constant 0 : index
    %3 = vector.load %arg3[%c0_3, %c0_4] : memref<1x128xf32, #tpu.memory_space<vmem>>, vector<1x128xf32>
    %4 = vector.broadcast %3 : vector<1x128xf32> to vector<64x128xf32>
    %5 = arith.addf %2, %4 : vector<64x128xf32>
    %6 = math.tanh %5 : vector<64x128xf32>
    %c0_5 = arith.constant 0 : index
    %c0_6 = arith.constant 0 : index
    %7 = vector.load %arg4[%c0_5, %c0_6] : memref<128x128xf32, #tpu.memory_space<vmem>>, vector<128x128xf32>
    %cst_7 = arith.constant dense<0.000000e+00> : vector<64x128xf32>
    %8 = tpu.matmul %6, %7, %cst_7 {dimension_numbers = #tpu.dot_dimension_numbers<[1], [0], [0], [1], [0, 0, 1, 1], [], []>} : vector<64x128xf32>, vector<128x128xf32>, vector<64x128xf32> -> vector<64x128xf32>
    %c0_8 = arith.constant 0 : index
    %c0_9 = arith.constant 0 : index
    %9 = vector.load %arg5[%c0_8, %c0_9] : memref<1x128xf32, #tpu.memory_space<vmem>>, vector<1x128xf32>
    %10 = vector.broadcast %9 : vector<1x128xf32> to vector<64x128xf32>
    %11 = arith.addf %8, %10 : vector<64x128xf32>
    %c0_10 = arith.constant 0 : index
    %c0_11 = arith.constant 0 : index
    %12 = vector.load %arg6[%c0_10, %c0_11] : memref<64x128xf32, #tpu.memory_space<vmem>>, vector<64x128xf32>
    tpu.vector_store %arg6[%c0_10, %c0_11], %11 {strides = array<i32>} : memref<64x128xf32, #tpu.memory_space<vmem>>, vector<64x128xf32>,
    return
  }
  func.func @transform_0(%arg0: i32) -> (i32, i32) {
    %c0_i32 = arith.constant 0 : i32
    %c0_i32_0 = arith.constant 0 : i32
    return %arg0, %c0_i32 : i32, i32
  }
  func.func @transform_1(%arg0: i32) -> (i32, i32) {
    %c0_i32 = arith.constant 0 : i32
    %c0_i32_0 = arith.constant 0 : i32
    %c0_i32_1 = arith.constant 0 : i32
    return %c0_i32, %c0_i32_0 : i32, i32
  }
  func.func @transform_2(%arg0: i32) -> (i32, i32) {
    %c0_i32 = arith.constant 0 : i32
    %c0_i32_0 = arith.constant 0 : i32
    %c0_i32_1 = arith.constant 0 : i32
    return %c0_i32, %c0_i32_0 : i32, i32
  }
  func.func @transform_3(%arg0: i32) -> (i32, i32) {
    %c0_i32 = arith.constant 0 : i32
    %c0_i32_0 = arith.constant 0 : i32
    %c0_i32_1 = arith.constant 0 : i32
    return %c0_i32, %c0_i32_0 : i32, i32
  }
  func.func @transform_4(%arg0: i32) -> (i32, i32) {
    %c0_i32 = arith.constant 0 : i32
    %c0_i32_0 = arith.constant 0 : i32
    %c0_i32_1 = arith.constant 0 : i32
    return %c0_i32, %c0_i32_0 : i32, i32
  }
  func.func @transform_5(%arg0: i32) -> (i32, i32) {
    %c0_i32 = arith.constant 0 : i32
    %c0_i32_0 = arith.constant 0 : i32
    return %arg0, %c0_i32 : i32, i32
  }
}

</mosaic_0001>

<llo_original>
// kernel: tpu_custom_call.1
$region0: #{tpu_custom_call.1}
  #allocation0 [shape = 'u32[]', space=smem, size = 0x4, offset = 0x4, fixed_abs, tag = 'smem constant byte address 0x4 - core index']
  #allocation1 [shape = 'u32[144,128]{1,0:T(1,128)}', space=vmem, size = 0x12000, scoped, tag = 'internal scratch']
  %s0 = inlined_call_operand.hbm [shape: f32[256,128], index: 0, kind: input, shape index: {}]
  %s1 = inlined_call_operand.hbm [shape: f32[128,128], index: 1, kind: input, shape index: {}]
  %s2 = inlined_call_operand.vmem [shape: f32[1,128], index: 2, kind: input, shape index: {}]
  %s3 = inlined_call_operand.hbm [shape: f32[128,128], index: 3, kind: input, shape index: {}]
  %s4 = inlined_call_operand.vmem [shape: f32[1,128], index: 4, kind: input, shape index: {}]
  %s5 = inlined_call_operand.hbm [shape: f32[256,128], index: 5, kind: output, shape index: {}]
  %s6 = sld [smem:[#allocation0]]
  $region65: #{tpu_custom_call.1} parent=0
    _
  %s8 = ssub.s32 1, %s6
  %s9 = scalar_select 0, %s8, %s6
  $region1: #{tpu_custom_call.1} parent=0
    #allocation2 [shape = 'u8[65536]{0}', space=vmem, size = 0x10000, scoped, tag = 'input window, operand 0']
    #allocation3 [shape = 's32[2]{0}', space=sflag, size = 0x8, scoped, tag = 'scoped memory for tpu_custom_call.1']
    #allocation4 [shape = 's32[2]{0}', space=sflag, size = 0x8, scoped, tag = 'scoped memory for tpu_custom_call.1']
    #allocation5 [shape = 'u8[65536]{0}', space=vmem, size = 0x10000, scoped, tag = 'input window, operand 1, single buffered']
    #allocation6 [shape = 's32[1]{0}', space=sflag, size = 0x4, scoped, tag = 'scoped memory for tpu_custom_call.1']
    #allocation7 [shape = 'u8[65536]{0}', space=vmem, size = 0x10000, scoped, tag = 'input window, operand 3, single buffered']
    #allocation8 [shape = 'u8[65536]{0}', space=vmem, size = 0x10000, scoped, tag = 'output window, operand 0']
    %10 = vsyncpa [#allocation3], 0
    %s11 = scalar_lea.sflag [#allocation3], 1
    %12 = vsyncpa %s11, 0
    %13 = vsyncpa [#allocation6], 0
    %14 = vsyncpa [#allocation4], 0
    %s15 = scalar_lea.sflag [#allocation4], 1
    %16 = vsyncpa %s15, 0
    loop: start=0, step=1, limit=6
    $region2: #{tpu_custom_call.1} parent=1 // loop_pre_header
      _
    $region3: #{tpu_custom_call.1} parent=1 // loop_header
      %s18 = sphi 0, %s22
      %p19 = scmp.ge.s32.totalorder %s18, 6
      %s28 = sphi 0, %s30
      %s31 = sphi 0, %s28
      %s32 = sphi 0, %s31
      %s48 = sphi 0, %s32
      %s52 = sphi 0, %s52
      %s54 = sphi 0, %s52
      %s55 = sphi 0, %s54
      %s69 = sphi 0, %s55
      %s73 = sphi 0, %s73
      %s75 = sphi 0, %s73
      %s76 = sphi 0, %s75
      %s90 = sphi 0, %s76
      %s94 = sphi 0, %s94
      %s96 = sphi 0, %s94
      %s97 = sphi 0, %s96
      %s111 = sphi 0, %s97
      %s115 = sphi 0, %s115
      %s117 = sphi 0, %s115
      %s118 = sphi 0, %s117
      %s132 = sphi 0, %s118
      %s138 = sphi 0, %s140
      %s141 = sphi 0, %s138
      %s142 = sphi 0, %s141
      %s158 = sphi 0, %s142
    $region4: #{tpu_custom_call.1} parent=1 // loop_header_branch
      %21 = sbr.rel (%p19) target = $region8
    $region5: #{tpu_custom_call.1} parent=1 // loop_body
      %s23 = ssub.s32 %s18, 1
      %s24 = ssub.s32 %s18, 2
      %s25 = sadd.s32 %s18, 1
      %s26 = ssub.s32 %s18, %s25
      %p27 = scmp.eq.s32.totalorder %s26, 0
      %s29 = sadd.s32 %s28, 1
      %s30 = scalar_select %p27, %s28, %s29
      %p33 = pneg %p27
      %p34 = scmp.eq.s32.totalorder %s18, 3
      %p35 = por %p33, %p34
      %p36 = scmp.ne.s32.totalorder %s28, %s31
      %p37 = scmp.eq.s32.totalorder %s18, 0
      %p38 = por %p36, %p37
      %p39 = scmp.ne.s32.totalorder %s28, %s31
      %p40 = scmp.eq.s32.totalorder %s23, 3
      %p41 = por %p39, %p40
      %p42 = scmp.ne.s32.totalorder %s31, %s32
      %p43 = scmp.eq.s32.totalorder %s23, 0
      %p44 = por %p42, %p43
      %p45 = scmp.ne.s32.totalorder %s31, %s32
      %p46 = scmp.eq.s32.totalorder %s24, 3
      %p47 = por %p45, %p46
      %p49 = scmp.ne.s32.totalorder %s32, %s48
      %p50 = scmp.eq.s32.totalorder %s24, 0
      %p51 = por %p49, %p50
      %s53 = sadd.s32 %s52, 1
      %p56 = scmp.eq.s32.totalorder %s18, 3
      %p57 = scmp.ne.s32.totalorder %s52, %s54
      %p58 = scmp.eq.s32.totalorder %s18, 0
      %p59 = por %p57, %p58
      %p60 = scmp.ne.s32.totalorder %s52, %s54
      %p61 = scmp.eq.s32.totalorder %s23, 3
      %p62 = por %p60, %p61
      %p63 = scmp.ne.s32.totalorder %s54, %s55
      %p64 = scmp.eq.s32.totalorder %s23, 0
      %p65 = por %p63, %p64
      %p66 = scmp.ne.s32.totalorder %s54, %s55
      %p67 = scmp.eq.s32.totalorder %s24, 3
      %p68 = por %p66, %p67
      %p70 = scmp.ne.s32.totalorder %s55, %s69
      %p71 = scmp.eq.s32.totalorder %s24, 0
      %p72 = por %p70, %p71
      %s74 = sadd.s32 %s73, 1
      %p77 = scmp.eq.s32.totalorder %s18, 3
      %p78 = scmp.ne.s32.totalorder %s73, %s75
      %p79 = scmp.eq.s32.totalorder %s18, 0
      %p80 = por %p78, %p79
      %p81 = scmp.ne.s32.totalorder %s73, %s75
      %p82 = scmp.eq.s32.totalorder %s23, 3
      %p83 = por %p81, %p82
      %p84 = scmp.ne.s32.totalorder %s75, %s76
      %p85 = scmp.eq.s32.totalorder %s23, 0
      %p86 = por %p84, %p85
      %p87 = scmp.ne.s32.totalorder %s75, %s76
      %p88 = scmp.eq.s32.totalorder %s24, 3
      %p89 = por %p87, %p88
      %p91 = scmp.ne.s32.totalorder %s76, %s90
      %p92 = scmp.eq.s32.totalorder %s24, 0
      %p93 = por %p91, %p92
      %s95 = sadd.s32 %s94, 1
      %p98 = scmp.eq.s32.totalorder %s18, 3
      %p99 = scmp.ne.s32.totalorder %s94, %s96
      %p100 = scmp.eq.s32.totalorder %s18, 0
      %p101 = por %p99, %p100
      %p102 = scmp.ne.s32.totalorder %s94, %s96
      %p103 = scmp.eq.s32.totalorder %s23, 3
      %p104 = por %p102, %p103
      %p105 = scmp.ne.s32.totalorder %s96, %s97
      %p106 = scmp.eq.s32.totalorder %s23, 0
      %p107 = por %p105, %p106
      %p108 = scmp.ne.s32.totalorder %s96, %s97
      %p109 = scmp.eq.s32.totalorder %s24, 3
      %p110 = por %p108, %p109
      %p112 = scmp.ne.s32.totalorder %s97, %s111
      %p113 = scmp.eq.s32.totalorder %s24, 0
      %p114 = por %p112, %p113
      %s116 = sadd.s32 %s115, 1
      %p119 = scmp.eq.s32.totalorder %s18, 3
      %p120 = scmp.ne.s32.totalorder %s115, %s117
      %p121 = scmp.eq.s32.totalorder %s18, 0
      %p122 = por %p120, %p121
      %p123 = scmp.ne.s32.totalorder %s115, %s117
      %p124 = scmp.eq.s32.totalorder %s23, 3
      %p125 = por %p123, %p124
      %p126 = scmp.ne.s32.totalorder %s117, %s118
      %p127 = scmp.eq.s32.totalorder %s23, 0
      %p128 = por %p126, %p127
      %p129 = scmp.ne.s32.totalorder %s117, %s118
      %p130 = scmp.eq.s32.totalorder %s24, 3
      %p131 = por %p129, %p130
      %p133 = scmp.ne.s32.totalorder %s118, %s132
      %p134 = scmp.eq.s32.totalorder %s24, 0
      %p135 = por %p133, %p134
      %s136 = ssub.s32 %s18, %s25
      %p137 = scmp.eq.s32.totalorder %s136, 0
      %s139 = sadd.s32 %s138, 1
      %s140 = scalar_select %p137, %s138, %s139
      %p143 = pneg %p137
      %p144 = scmp.eq.s32.totalorder %s18, 3
      %p145 = por %p143, %p144
      %p146 = scmp.ne.s32.totalorder %s138, %s141
      %p147 = scmp.eq.s32.totalorder %s18, 0
      %p148 = por %p146, %p147
      %p149 = scmp.ne.s32.totalorder %s138, %s141
      %p150 = scmp.eq.s32.totalorder %s23, 3
      %p151 = por %p149, %p150
      %p152 = scmp.ne.s32.totalorder %s141, %s142
      %p153 = scmp.eq.s32.totalorder %s23, 0
      %p154 = por %p152, %p153
      %p155 = scmp.ne.s32.totalorder %s141, %s142
      %p156 = scmp.eq.s32.totalorder %s24, 3
      %p157 = por %p155, %p156
      %p159 = scmp.ne.s32.totalorder %s142, %s158
      %p160 = scmp.eq.s32.totalorder %s24, 0
      %p161 = por %p159, %p160
      %p162 = scmp.le.s32.totalorder 1, %s18
      %p163 = scmp.lt.s32.totalorder %s18, 5
      %p164 = pnand %p162, %p163
      %p165 = pneg %p164
      // Predicated region
      $region9: #{tpu_custom_call.1} parent=5 // pred_check
        _
      $region10: #{tpu_custom_call.1} parent=5 // pred_check_branch
        %167 = sbr.rel (%p164) target = $region12
      $region11: #{tpu_custom_call.1} parent=5 // pred_region
        %s168 = ssub.s32 %s18, 1
        // Predicated region
        $region13: #{tpu_custom_call.1} parent=11 // pred_check
          %p169 = pneg %p65
        $region14: #{tpu_custom_call.1} parent=11 // pred_check_branch
          %171 = sbr.rel (%p169) target = $region16
        $region15: #{tpu_custom_call.1} parent=11 // pred_region
          %s173 = ssub.s32 2048, 2048
          %174 = vsyncadd [#allocation6], %s173
          %s175 = sshll.u32 [#allocation5], 4
          %s176 = int_to_ptr.vmem [resolvable:$true] %s175
          %181 = dma.hbm_to_vmem [thread:$0]  %s1, 2048, %s176, [#allocation6], 128, 128, 8
        $region16: #{tpu_custom_call.1} parent=11 // pred_fallthru
          _
        // Predicated region
        $region17: #{tpu_custom_call.1} parent=11 // pred_check
          %p182 = pneg %p86
        $region18: #{tpu_custom_call.1} parent=11 // pred_check_branch
          %184 = sbr.rel (%p182) target = $region20
        $region19: #{tpu_custom_call.1} parent=11 // pred_region
          _
        $region20: #{tpu_custom_call.1} parent=11 // pred_fallthru
          _
        // Predicated region
        $region21: #{tpu_custom_call.1} parent=11 // pred_check
          %p185 = pneg %p107
        $region22: #{tpu_custom_call.1} parent=11 // pred_check_branch
          %187 = sbr.rel (%p185) target = $region24
        $region23: #{tpu_custom_call.1} parent=11 // pred_region
          %s189 = ssub.s32 2048, 2048
          %190 = vsyncadd [#allocation6], %s189
          %s191 = sshll.u32 [#allocation7], 4
          %s192 = int_to_ptr.vmem [resolvable:$true] %s191
          %197 = dma.hbm_to_vmem [thread:$0]  %s3, 2048, %s192, [#allocation6], 128, 128, 8
        $region24: #{tpu_custom_call.1} parent=11 // pred_fallthru
          _
        // Predicated region
        $region25: #{tpu_custom_call.1} parent=11 // pred_check
          %p198 = pneg %p128
        $region26: #{tpu_custom_call.1} parent=11 // pred_check_branch
          %200 = sbr.rel (%p198) target = $region28
        $region27: #{tpu_custom_call.1} parent=11 // pred_region
          _
        $region28: #{tpu_custom_call.1} parent=11 // pred_fallthru
          _
      $region12: #{tpu_custom_call.1} parent=5 // pred_fallthru
        _
      %p201 = scmp.lt.s32.totalorder %s18, 4
      // Predicated region
      $region29: #{tpu_custom_call.1} parent=5 // pred_check
        %p202 = pneg %p201
      $region30: #{tpu_custom_call.1} parent=5 // pred_check_branch
        %204 = sbr.rel (%p202) target = $region32
      $region31: #{tpu_custom_call.1} parent=5 // pred_region
        // Predicated region
        $region33: #{tpu_custom_call.1} parent=31 // pred_check
          %p205 = pneg %p38
        $region34: #{tpu_custom_call.1} parent=31 // pred_check_branch
          %207 = sbr.rel (%p205) target = $region36
        $region35: #{tpu_custom_call.1} parent=31 // pred_region
          %s208 = sand.u32 %s28, 1
          %s209 = scalar_lea.sflag [#allocation3], %s208
          %s210 = sand.u32 %s28, 1
          %s211 = smul.addr %s210, 64
          %s212 = scalar_lea.vmem [#allocation2], %s211
          %s213 = smul.u32 8, %s18
          %s215 = ssub.s32 1024, 1024
          %216 = vsyncadd %s209, %s215
          %s217 = smul.addr %s213, 128
          %s218 = scalar_lea.hbm %s0, %s217
          %s219 = sshll.u32 %s212, 4
          %s220 = int_to_ptr.vmem [resolvable:$true] %s219
          %225 = dma.hbm_to_vmem [thread:$0]  %s218, 1024, %s220, %s209, 128, 128, 8
        $region36: #{tpu_custom_call.1} parent=31 // pred_fallthru
          _
      $region32: #{tpu_custom_call.1} parent=5 // pred_fallthru
        _
      %p226 = scmp.le.s32.totalorder 1, %s18
      %p227 = scmp.lt.s32.totalorder %s18, 5
      %p228 = pnand %p226, %p227
      %p229 = pneg %p228
      // Predicated region
      $region37: #{tpu_custom_call.1} parent=5 // pred_check
        _
      $region38: #{tpu_custom_call.1} parent=5 // pred_check_branch
        %231 = sbr.rel (%p228) target = $region40
      $region39: #{tpu_custom_call.1} parent=5 // pred_region
        %s232 = ssub.s32 %s18, 1
        %s233 = sand.u32 %s31, 1
        %s234 = scalar_lea.sflag [#allocation3], %s233
        %s235 = sand.u32 %s31, 1
        %s236 = smul.addr %s235, 64
        %s237 = scalar_lea.vmem [#allocation2], %s236
        // Predicated region
        $region41: #{tpu_custom_call.1} parent=39 // pred_check
          %p238 = pneg %p44
        $region42: #{tpu_custom_call.1} parent=39 // pred_check_branch
          %240 = sbr.rel (%p238) target = $region44
        $region43: #{tpu_custom_call.1} parent=39 // pred_region
          %241 = dma.done %s234, 1024
        $region44: #{tpu_custom_call.1} parent=39 // pred_fallthru
          _
        // Predicated region
        $region45: #{tpu_custom_call.1} parent=39 // pred_check
          %p242 = pneg %p65
        $region46: #{tpu_custom_call.1} parent=39 // pred_check_branch
          %244 = sbr.rel (%p242) target = $region48
        $region47: #{tpu_custom_call.1} parent=39 // pred_region
          %245 = dma.done [#allocation6], 2048
        $region48: #{tpu_custom_call.1} parent=39 // pred_fallthru
          _
        // Predicated region
        $region49: #{tpu_custom_call.1} parent=39 // pred_check
          %p246 = pneg %p107
        $region50: #{tpu_custom_call.1} parent=39 // pred_check_branch
          %248 = sbr.rel (%p246) target = $region52
        $region51: #{tpu_custom_call.1} parent=39 // pred_region
          %249 = dma.done [#allocation6], 2048
        $region52: #{tpu_custom_call.1} parent=39 // pred_fallthru
          _
        %s250 = sand.u32 %s31, 1
        %s251 = scalar_lea.sflag [#allocation3], %s250
        %s252 = sand.u32 %s31, 1
        %s253 = smul.addr %s252, 64
        %s254 = scalar_lea.vmem [#allocation2], %s253
        %p255 = pneg %p44
        %p256 = pneg %p41
        %p257 = pneg %p65
        %p258 = pneg %p62
        %p259 = pneg %p86
        %p260 = pneg %p83
        %p261 = pneg %p107
        %p262 = pneg %p104
        %p263 = pneg %p128
        %p264 = pneg %p125
        %p265 = pneg %p154
        %p266 = pneg %p151
        %s267 = sand.u32 %s141, 1
        %s268 = scalar_lea.sflag [#allocation4], %s267
        %s269 = sand.u32 %s141, 1
        %s270 = smul.addr %s269, 64
        %s271 = scalar_lea.vmem [#allocation8], %s270
        %s272 = smul.u32 8, %s23
        %s273 = smul.u32 8, %s23
        %v274 = vld [vmem:[%s237] sm:$0xff]
        %v275 = vld [vmem:[%s237 + $0x8] sm:$0xff]
        %v276 = vld [vmem:[%s237 + $0x10] sm:$0xff]
        %v277 = vld [vmem:[%s237 + $0x18] sm:$0xff]
        %v278 = vld [vmem:[%s237 + $0x20] sm:$0xff]
        %v279 = vld [vmem:[%s237 + $0x28] sm:$0xff]
        %v280 = vld [vmem:[%s237 + $0x30] sm:$0xff]
        %v281 = vld [vmem:[%s237 + $0x38] sm:$0xff]
        %v282 = vld [vmem:[#allocation5] sm:$0xff]
        %v283 = vld [vmem:[#allocation5 + $0x8] sm:$0xff]
        %v284 = vld [vmem:[#allocation5 + $0x10] sm:$0xff]
        %v285 = vld [vmem:[#allocation5 + $0x18] sm:$0xff]
        %v286 = vld [vmem:[#allocation5 + $0x20] sm:$0xff]
        %v287 = vld [vmem:[#allocation5 + $0x28] sm:$0xff]
        %v288 = vld [vmem:[#allocation5 + $0x30] sm:$0xff]
        %v289 = vld [vmem:[#allocation5 + $0x38] sm:$0xff]
        %v290 = vld [vmem:[#allocation5 + $0x40] sm:$0xff]
        %v291 = vld [vmem:[#allocation5 + $0x48] sm:$0xff]
        %v292 = vld [vmem:[#allocation5 + $0x50] sm:$0xff]
        %v293 = vld [vmem:[#allocation5 + $0x58] sm:$0xff]
        %v294 = vld [vmem:[#allocation5 + $0x60] sm:$0xff]
        %v295 = vld [vmem:[#allocation5 + $0x68] sm:$0xff]
        %v296 = vld [vmem:[#allocation5 + $0x70] sm:$0xff]
        %v297 = vld [vmem:[#allocation5 + $0x78] sm:$0xff]
        %v298 = vld [vmem:[%s2] sm:$0x1]
        %v300 = vlaneseq
        %v301 = vshrl.u32 %v300, 7
        %v302 = vsub.s32 0, %v301
        %v303 = vrot.slane %v298, %v302
        %305 = vmatprep.subr.mxu0 0.0
        %306 = vmatpush1.msra.mxu0 %v297
        %307 = vmatprep.subr.mxu0 0.0
        %308 = vmatpush1.msra.mxu0 %v296
        %309 = vmatprep.subr.mxu0 0.0
        %310 = vmatpush1.msra.mxu0 %v295
        %311 = vmatprep.subr.mxu0 0.0
        %312 = vmatpush1.msra.mxu0 %v294
        %313 = vmatprep.subr.mxu0 0.0
        %314 = vmatpush1.msra.mxu0 %v293
        %315 = vmatprep.subr.mxu0 0.0
        %316 = vmatpush1.msra.mxu0 %v292
        %317 = vmatprep.subr.mxu0 0.0
        %318 = vmatpush1.msra.mxu0 %v291
        %319 = vmatprep.subr.mxu0 0.0
        %320 = vmatpush1.msra.mxu0 %v290
        %321 = vmatprep.subr.mxu0 0.0
        %322 = vmatpush1.msra.mxu0 %v289
        %323 = vmatprep.subr.mxu0 0.0
        %324 = vmatpush1.msra.mxu0 %v288
        %325 = vmatprep.subr.mxu0 0.0
        %326 = vmatpush1.msra.mxu0 %v287
        %327 = vmatprep.subr.mxu0 0.0
        %328 = vmatpush1.msra.mxu0 %v286
        %329 = vmatprep.subr.mxu0 0.0
        %330 = vmatpush1.msra.mxu0 %v285
        %331 = vmatprep.subr.mxu0 0.0
        %332 = vmatpush1.msra.mxu0 %v284
        %333 = vmatprep.subr.mxu0 0.0
        %334 = vmatpush1.msra.mxu0 %v283
        %335 = vmatprep.subr.mxu0 0.0
        %336 = vmatpush1.msra.mxu0 %v282
        %337 = vmatprep.subr.mxu0 0.0
        %338 = vmatpush2.msra.mxu0 0.0
        %339 = vmatprep.subr.mxu0 0.0
        %340 = vmatpush2.msra.mxu0 0.0
        %341 = vmatprep.subr.mxu0 0.0
        %342 = vmatpush2.msra.mxu0 0.0
        %343 = vmatprep.subr.mxu0 0.0
        %344 = vmatpush2.msra.mxu0 0.0
        %345 = vmatprep.subr.mxu0 0.0
        %346 = vmatpush2.msra.mxu0 0.0
        %347 = vmatprep.subr.mxu0 0.0
        %348 = vmatpush2.msra.mxu0 0.0
        %349 = vmatprep.subr.mxu0 0.0
        %350 = vmatpush2.msra.mxu0 0.0
        %351 = vmatprep.subr.mxu0 0.0
        %352 = vmatpush2.msra.mxu0 0.0
        %353 = vmatprep.subr.mxu0 0.0
        %354 = vmatpush2.msra.mxu0 0.0
        %355 = vmatprep.subr.mxu0 0.0
        %356 = vmatpush2.msra.mxu0 0.0
        %357 = vmatprep.subr.mxu0 0.0
        %358 = vmatpush2.msra.mxu0 0.0
        %359 = vmatprep.subr.mxu0 0.0
        %360 = vmatpush2.msra.mxu0 0.0
        %361 = vmatprep.subr.mxu0 0.0
        %362 = vmatpush2.msra.mxu0 0.0
        %363 = vmatprep.subr.mxu0 0.0
        %364 = vmatpush2.msra.mxu0 0.0
        %365 = vmatprep.subr.mxu0 0.0
        %366 = vmatpush2.msra.mxu0 0.0
        %367 = vmatprep.subr.mxu0 0.0
        %368 = vmatpush2.msra.mxu0 0.0
        %369 = vmatprep.mubr.f32.mxu0 0.0
        %370 = vmatmul.mubr.f32.gmra.mxu0 %v274
        %v371 = vpop.f32.mrf.mxu0
        %v372 = vadd.f32 %v303, %v371
        %v373 = vpop.f32.mrf.mxu0
        %374 = vmatprep.mubr.f32.mxu0 0.0
        %375 = vmatmul.mubr.f32.gmra.mxu0 %v275
        %v376 = vpop.f32.mrf.mxu0
        %v377 = vadd.f32 %v303, %v376
        %v378 = vpop.f32.mrf.mxu0
        %379 = vmatprep.mubr.f32.mxu0 0.0
        %380 = vmatmul.mubr.f32.gmra.mxu0 %v276
        %v381 = vpop.f32.mrf.mxu0
        %v382 = vadd.f32 %v303, %v381
        %v383 = vpop.f32.mrf.mxu0
        %384 = vmatprep.mubr.f32.mxu0 0.0
        %385 = vmatmul.mubr.f32.gmra.mxu0 %v277
        %v386 = vpop.f32.mrf.mxu0
        %v387 = vadd.f32 %v303, %v386
        %v388 = vpop.f32.mrf.mxu0
        %389 = vmatprep.mubr.f32.mxu0 0.0
        %390 = vmatmul.mubr.f32.gmra.mxu0 %v278
        %v391 = vpop.f32.mrf.mxu0
        %v392 = vadd.f32 %v303, %v391
        %v393 = vpop.f32.mrf.mxu0
        %394 = vmatprep.mubr.f32.mxu0 0.0
        %395 = vmatmul.mubr.f32.gmra.mxu0 %v279
        %v396 = vpop.f32.mrf.mxu0
        %v397 = vadd.f32 %v303, %v396
        %v398 = vpop.f32.mrf.mxu0
        %399 = vmatprep.mubr.f32.mxu0 0.0
        %400 = vmatmul.mubr.f32.gmra.mxu0 %v280
        %v401 = vpop.f32.mrf.mxu0
        %v402 = vadd.f32 %v303, %v401
        %v403 = vpop.f32.mrf.mxu0
        %404 = vmatprep.mubr.f32.mxu0 0.0
        %405 = vmatmul.mubr.f32.gmra.mxu0 %v281
        %v406 = vpop.f32.mrf.mxu0
        %v407 = vadd.f32 %v303, %v406
        %v408 = vpop.f32.mrf.mxu0
        %409 = vdwg.mxu0
        %v410 = vtanh.pop %v372
        %v411 = vtanh.pop %v377
        %v412 = vtanh.pop %v382
        %v413 = vtanh.pop %v387
        %v414 = vtanh.pop %v392
        %v415 = vtanh.pop %v397
        %v416 = vtanh.pop %v402
        %v417 = vtanh.pop %v407
        %v418 = vld [vmem:[#allocation7] sm:$0xff]
        %v419 = vld [vmem:[#allocation7 + $0x8] sm:$0xff]
        %v420 = vld [vmem:[#allocation7 + $0x10] sm:$0xff]
        %v421 = vld [vmem:[#allocation7 + $0x18] sm:$0xff]
        %v422 = vld [vmem:[#allocation7 + $0x20] sm:$0xff]
        %v423 = vld [vmem:[#allocation7 + $0x28] sm:$0xff]
        %v424 = vld [vmem:[#allocation7 + $0x30] sm:$0xff]
        %v425 = vld [vmem:[#allocation7 + $0x38] sm:$0xff]
        %v426 = vld [vmem:[#allocation7 + $0x40] sm:$0xff]
        %v427 = vld [vmem:[#allocation7 + $0x48] sm:$0xff]
        %v428 = vld [vmem:[#allocation7 + $0x50] sm:$0xff]
        %v429 = vld [vmem:[#allocation7 + $0x58] sm:$0xff]
        %v430 = vld [vmem:[#allocation7 + $0x60] sm:$0xff]
        %v431 = vld [vmem:[#allocation7 + $0x68] sm:$0xff]
        %v432 = vld [vmem:[#allocation7 + $0x70] sm:$0xff]
        %v433 = vld [vmem:[#allocation7 + $0x78] sm:$0xff]
        %v434 = vld [vmem:[%s4] sm:$0x1]
        %v436 = vlaneseq
        %v437 = vshrl.u32 %v436, 7
        %v438 = vsub.s32 0, %v437
        %v439 = vrot.slane %v434, %v438
        %441 = vmatprep.subr.mxu0 0.0
        %442 = vmatpush1.msra.mxu0 %v433
        %443 = vmatprep.subr.mxu0 0.0
        %444 = vmatpush1.msra.mxu0 %v432
        %445 = vmatprep.subr.mxu0 0.0
        %446 = vmatpush1.msra.mxu0 %v431
        %447 = vmatprep.subr.mxu0 0.0
        %448 = vmatpush1.msra.mxu0 %v430
        %449 = vmatprep.subr.mxu0 0.0
        %450 = vmatpush1.msra.mxu0 %v429
        %451 = vmatprep.subr.mxu0 0.0
        %452 = vmatpush1.msra.mxu0 %v428
        %453 = vmatprep.subr.mxu0 0.0
        %454 = vmatpush1.msra.mxu0 %v427
        %455 = vmatprep.subr.mxu0 0.0
        %456 = vmatpush1.msra.mxu0 %v426
        %457 = vmatprep.subr.mxu0 0.0
        %458 = vmatpush1.msra.mxu0 %v425
        %459 = vmatprep.subr.mxu0 0.0
        %460 = vmatpush1.msra.mxu0 %v424
        %461 = vmatprep.subr.mxu0 0.0
        %462 = vmatpush1.msra.mxu0 %v423
        %463 = vmatprep.subr.mxu0 0.0
        %464 = vmatpush1.msra.mxu0 %v422
        %465 = vmatprep.subr.mxu0 0.0
        %466 = vmatpush1.msra.mxu0 %v421
        %467 = vmatprep.subr.mxu0 0.0
        %468 = vmatpush1.msra.mxu0 %v420
        %469 = vmatprep.subr.mxu0 0.0
        %470 = vmatpush1.msra.mxu0 %v419
        %471 = vmatprep.subr.mxu0 0.0
        %472 = vmatpush1.msra.mxu0 %v418
        %473 = vmatprep.subr.mxu0 0.0
        %474 = vmatpush2.msra.mxu0 0.0
        %475 = vmatprep.subr.mxu0 0.0
        %476 = vmatpush2.msra.mxu0 0.0
        %477 = vmatprep.subr.mxu0 0.0
        %478 = vmatpush2.msra.mxu0 0.0
        %479 = vmatprep.subr.mxu0 0.0
        %480 = vmatpush2.msra.mxu0 0.0
        %481 = vmatprep.subr.mxu0 0.0
        %482 = vmatpush2.msra.mxu0 0.0
        %483 = vmatprep.subr.mxu0 0.0
        %484 = vmatpush2.msra.mxu0 0.0
        %485 = vmatprep.subr.mxu0 0.0
        %486 = vmatpush2.msra.mxu0 0.0
        %487 = vmatprep.subr.mxu0 0.0
        %488 = vmatpush2.msra.mxu0 0.0
        %489 = vmatprep.subr.mxu0 0.0
        %490 = vmatpush2.msra.mxu0 0.0
        %491 = vmatprep.subr.mxu0 0.0
        %492 = vmatpush2.msra.mxu0 0.0
        %493 = vmatprep.subr.mxu0 0.0
        %494 = vmatpush2.msra.mxu0 0.0
        %495 = vmatprep.subr.mxu0 0.0
        %496 = vmatpush2.msra.mxu0 0.0
        %497 = vmatprep.subr.mxu0 0.0
        %498 = vmatpush2.msra.mxu0 0.0
        %499 = vmatprep.subr.mxu0 0.0
        %500 = vmatpush2.msra.mxu0 0.0
        %501 = vmatprep.subr.mxu0 0.0
        %502 = vmatpush2.msra.mxu0 0.0
        %503 = vmatprep.subr.mxu0 0.0
        %504 = vmatpush2.msra.mxu0 0.0
        %505 = vmatprep.mubr.f32.mxu0 0.0
        %506 = vmatmul.mubr.f32.gmra.mxu0 %v410
        %v507 = vpop.f32.mrf.mxu0
        %v508 = vadd.f32 %v439, %v507
        %v509 = vpop.f32.mrf.mxu0
        %510 = vmatprep.mubr.f32.mxu0 0.0
        %511 = vmatmul.mubr.f32.gmra.mxu0 %v411
        %v512 = vpop.f32.mrf.mxu0
        %v513 = vadd.f32 %v439, %v512
        %v514 = vpop.f32.mrf.mxu0
        %515 = vmatprep.mubr.f32.mxu0 0.0
        %516 = vmatmul.mubr.f32.gmra.mxu0 %v412
        %v517 = vpop.f32.mrf.mxu0
        %v518 = vadd.f32 %v439, %v517
        %v519 = vpop.f32.mrf.mxu0
        %520 = vmatprep.mubr.f32.mxu0 0.0
        %521 = vmatmul.mubr.f32.gmra.mxu0 %v413
        %v522 = vpop.f32.mrf.mxu0
        %v523 = vadd.f32 %v439, %v522
        %v524 = vpop.f32.mrf.mxu0
        %525 = vmatprep.mubr.f32.mxu0 0.0
        %526 = vmatmul.mubr.f32.gmra.mxu0 %v414
        %v527 = vpop.f32.mrf.mxu0
        %v528 = vadd.f32 %v439, %v527
        %v529 = vpop.f32.mrf.mxu0
        %530 = vmatprep.mubr.f32.mxu0 0.0
        %531 = vmatmul.mubr.f32.gmra.mxu0 %v415
        %v532 = vpop.f32.mrf.mxu0
        %v533 = vadd.f32 %v439, %v532
        %v534 = vpop.f32.mrf.mxu0
        %535 = vmatprep.mubr.f32.mxu0 0.0
        %536 = vmatmul.mubr.f32.gmra.mxu0 %v416
        %v537 = vpop.f32.mrf.mxu0
        %v538 = vadd.f32 %v439, %v537
        %v539 = vpop.f32.mrf.mxu0
        %540 = vmatprep.mubr.f32.mxu0 0.0
        %541 = vmatmul.mubr.f32.gmra.mxu0 %v417
        %v542 = vpop.f32.mrf.mxu0
        %v543 = vadd.f32 %v439, %v542
        %v544 = vpop.f32.mrf.mxu0
        %545 = vdwg.mxu0
        %546 = vst [vmem:[%s271] sm:$0xff] %v508
        %547 = vst [vmem:[%s271 + $0x8] sm:$0xff] %v513
        %548 = vst [vmem:[%s271 + $0x10] sm:$0xff] %v518
        %549 = vst [vmem:[%s271 + $0x18] sm:$0xff] %v523
        %550 = vst [vmem:[%s271 + $0x20] sm:$0xff] %v528
        %551 = vst [vmem:[%s271 + $0x28] sm:$0xff] %v533
        %552 = vst [vmem:[%s271 + $0x30] sm:$0xff] %v538
        %553 = vst [vmem:[%s271 + $0x38] sm:$0xff] %v543
        %s554 = sand.u32 %s141, 1
        %s555 = scalar_lea.sflag [#allocation4], %s554
        %s556 = sand.u32 %s141, 1
        %s557 = smul.addr %s556, 64
        %s558 = scalar_lea.vmem [#allocation8], %s557
        // Predicated region
        $region53: #{tpu_custom_call.1} parent=39 // pred_check
          %p559 = pneg %p151
        $region54: #{tpu_custom_call.1} parent=39 // pred_check_branch
          %561 = sbr.rel (%p559) target = $region56
        $region55: #{tpu_custom_call.1} parent=39 // pred_region
          %s562 = smul.u32 8, %s23
          %s564 = ssub.s32 1024, 1024
          %565 = vsyncadd %s555, %s564
          %s566 = smul.addr %s562, 128
          %s567 = scalar_lea.hbm %s5, %s566
          %s568 = sshll.u32 %s558, 4
          %s569 = int_to_ptr.vmem [resolvable:$true] %s568
          %574 = dma.vmem_to_hbm [thread:$0]  %s569, 1024, %s567, %s555, 128, 128, 8
        $region56: #{tpu_custom_call.1} parent=39 // pred_fallthru
          _
      $region40: #{tpu_custom_call.1} parent=5 // pred_fallthru
        _
      %p575 = scmp.le.s32.totalorder 2, %s18
      // Predicated region
      $region57: #{tpu_custom_call.1} parent=5 // pred_check
        %p576 = pneg %p575
      $region58: #{tpu_custom_call.1} parent=5 // pred_check_branch
        %578 = sbr.rel (%p576) target = $region60
      $region59: #{tpu_custom_call.1} parent=5 // pred_region
        %s579 = ssub.s32 %s18, 2
        // Predicated region
        $region61: #{tpu_custom_call.1} parent=59 // pred_check
          %p580 = pneg %p157
        $region62: #{tpu_custom_call.1} parent=59 // pred_check_branch
          %582 = sbr.rel (%p580) target = $region64
        $region63: #{tpu_custom_call.1} parent=59 // pred_region
          %s583 = sand.u32 %s142, 1
          %s584 = scalar_lea.sflag [#allocation4], %s583
          %s585 = sand.u32 %s142, 1
          %s586 = smul.addr %s585, 64
          %s587 = scalar_lea.vmem [#allocation8], %s586
          %588 = dma.done %s584, 1024
        $region64: #{tpu_custom_call.1} parent=59 // pred_fallthru
          _
      $region60: #{tpu_custom_call.1} parent=5 // pred_fallthru
        _
    $region6: #{tpu_custom_call.1} parent=1 // loop_footer
      %s22 = sadd.s32 1, %s18
    $region7: #{tpu_custom_call.1} parent=1 // loop_footer_branch
      %17 = sbr.rel target = $region3
    $region8: #{tpu_custom_call.1} parent=1 // loop_exit
      _
    %589 = vsyncpa [#allocation3], 1
    %s590 = scalar_lea.sflag [#allocation3], 1
    %591 = vsyncpa %s590, 1
    %592 = vsyncpa [#allocation6], 1
    %593 = vsyncpa [#allocation4], 1
    %s594 = scalar_lea.sflag [#allocation4], 1
    %595 = vsyncpa %s594, 1

</llo_original>
